<compile_context>
chip_gen: v6e
topology: v6e:2x2x1
jax: 0.10.0
libtpu: 0.0.40
codegen_flags: <defaults>
</compile_context>

<pallas_src>
import functools

import jax
import jax.numpy as jnp
from jax import lax
from jax.experimental import pallas as pl
from jax.experimental.pallas import tpu as pltpu


def _round_up(x, m):
    return ((x + m - 1) // m) * m


def _margin_mse_kernel(ms_ref, mt_ref, out_ref, *, k, b, tb):
    # ms_ref / mt_ref: (TB, K) tiles. The last grid block may hang over the
    # end of the batch; those rows contain unspecified data and MUST be
    # masked before any reduction.
    d = ms_ref[...].astype(jnp.float32) - mt_ref[...].astype(jnp.float32)

    row = pl.program_id(0) * tb + lax.broadcasted_iota(jnp.int32, (tb, 1), 0)
    d = jnp.where(row < b, d, 0.0)                      # (TB, K), masked rows -> 0

    # Centered per-row closed form:
    #   sum_{i,j}(d_i - d_j)^2 = 2*K * sum_i (d_i - mean(d))^2
    mean = jnp.sum(d, axis=-1, keepdims=True) * (1.0 / k)   # (TB, 1); 0 on masked rows
    c = d - mean                                             # 0 on masked rows
    out_ref[...] = (2.0 * k) * jnp.sum(c * c, axis=-1, keepdims=True)  # (TB, 1)


def margin_mse(M_s, M_t):
    assert M_s.ndim == 2 and M_t.ndim == 2 and M_s.shape == M_t.shape
    B, K = M_s.shape
    itemsize = max(jnp.dtype(M_s.dtype).itemsize, jnp.dtype(M_t.dtype).itemsize)

    # --- batch-tile selection -------------------------------------------------
    # Target ~6 MiB per input tile (2 inputs x 2 pipeline buffers ~= 24 MiB),
    # which fits every chip generation's VMEM once vmem_limit_bytes is raised.
    TILE_BYTE_BUDGET = 6 * 1024 * 1024
    row_bytes = max(K * itemsize, 1)
    tb_cap = max(8, (TILE_BYTE_BUDGET // row_bytes) // 8 * 8)

    B8 = _round_up(max(B, 1), 8)
    if B8 <= tb_cap:
        if B8 >= 16:
            # Whole batch fits in one tile -> still split into 2 blocks so the
            # "parallel" axis can shard across both TensorCores (v7x).
            TB = _round_up(-(-B8 // 2), 8)
        else:
            TB = B8
    else:
        TB = tb_cap
    num_blocks = pl.cdiv(B, TB)

    tile_bytes = TB * K * itemsize
    needed_vmem = 4 * tile_bytes + (2 << 20)            # 2 inputs x 2 buffers + slack
    vmem_limit = int(min(64 << 20, max(32 << 20, needed_vmem)))

    out_rows = num_blocks * TB

    partials = pl.pallas_call(
        functools.partial(_margin_mse_kernel, k=K, b=B, tb=TB),
        out_shape=jax.ShapeDtypeStruct((out_rows, 1), jnp.float32),
        grid_spec=pltpu.PrefetchScalarGridSpec(
            num_scalar_prefetch=0,
            grid=(num_blocks,),
            in_specs=[
                pl.BlockSpec((TB, K), lambda i: (i, 0)),
                pl.BlockSpec((TB, K), lambda i: (i, 0)),
            ],
            out_specs=pl.BlockSpec((TB, 1), lambda i: (i, 0)),
        ),
        compiler_params=pltpu.CompilerParams(
            dimension_semantics=("parallel",),
            vmem_limit_bytes=vmem_limit,
        ),
        cost_estimate=pl.CostEstimate(
            flops=5 * B * K,
            transcendentals=0,
            bytes_accessed=2 * B * K * itemsize + out_rows * 4,
        ),
    )(M_s, M_t)

    # mean over the ORIGINAL B*K*K pairwise-squared-margin terms
    return jnp.sum(partials) / jnp.float32(B * K * K)


def _margin_mse_ref(M_s, M_t):
    ms = M_s.astype(jnp.float32)
    mt = M_t.astype(jnp.float32)
    ds = ms[:, :, None] - ms[:, None, :]
    dt = mt[:, :, None] - mt[:, None, :]
    return jnp.mean((ds - dt) ** 2)


if __name__ == "__main__":
    key = jax.random.PRNGKey(0)
    k1, k2 = jax.random.split(key)

    # B queries, K candidate docs each (small shapes per the module spec)
    B, K = 2, 8
    M_s = jax.random.normal(k1, (B, K), dtype=jnp.float32)
    M_t = jax.random.normal(k2, (B, K), dtype=jnp.float32)

    loss = jax.block_until_ready(margin_mse(M_s, M_t))
    ref = _margin_mse_ref(M_s, M_t)
    assert jnp.allclose(loss, ref, rtol=1e-5, atol=1e-6), (loss, ref)

    # Non-tiny, non-aligned shape: exercises multi-block grid + in-kernel
    # row masking of the partial last block (no wrapper padding anymore).
    B2, K2 = 37, 200
    a = jax.random.normal(k1, (B2, K2), dtype=jnp.float32)
    b = jax.random.normal(k2, (B2, K2), dtype=jnp.float32)
    loss2 = jax.block_until_ready(margin_mse(a, b))
    ref2 = _margin_mse_ref(a, b)
    assert jnp.allclose(loss2, ref2, rtol=1e-4, atol=1e-5), (loss2, ref2)

    # Large common offset between student and teacher scores: the centered
    # closed form must stay well-conditioned in f32.
    a3 = jax.random.normal(k1, (16, 32), dtype=jnp.float32) + 1000.0
    b3 = jax.random.normal(k2, (16, 32), dtype=jnp.float32)
    loss3 = jax.block_until_ready(margin_mse(a3, b3))
    ref3 = _margin_mse_ref(a3, b3)
    assert jnp.allclose(loss3, ref3, rtol=1e-3, atol=1e-3), (loss3, ref3)

    print("KERNEL_OK")
</pallas_src>

<mosaic_0001>
module attributes {stable_mosaic.version = 11 : i64} {
  func.func @_margin_mse_kernel(%arg0: i32, %arg1: memref<8x8xf32, #tpu.memory_space<vmem>>, %arg2: memref<8x8xf32, #tpu.memory_space<vmem>>, %arg3: memref<8x1xf32, #tpu.memory_space<vmem>>) attributes {dimension_semantics = [#tpu.dimension_semantics<parallel>], iteration_bounds = array<i64: 1>, scalar_prefetch = 0 : i64, scratch_operands = 0 : i64, tpu.core_type = #tpu.core_type<tc>, window_params = [{transform_indices = @transform_0, window_bounds = array<i64: 8, 8>}, {transform_indices = @transform_1, window_bounds = array<i64: 8, 8>}, {transform_indices = @transform_2, window_bounds = array<i64: 8, 1>}]} {
    %c0 = arith.constant 0 : index
    %c0_0 = arith.constant 0 : index
    %0 = vector.load %arg1[%c0, %c0_0] : memref<8x8xf32, #tpu.memory_space<vmem>>, vector<8x8xf32>
    %c0_1 = arith.constant 0 : index
    %c0_2 = arith.constant 0 : index
    %1 = vector.load %arg2[%c0_1, %c0_2] : memref<8x8xf32, #tpu.memory_space<vmem>>, vector<8x8xf32>
    %2 = arith.subf %0, %1 : vector<8x8xf32>
    %c8_i32 = arith.constant 8 : i32
    %3 = arith.muli %arg0, %c8_i32 : i32
    %4 = tpu.iota {dimensions = array<i32: 0>} : vector<8x1xi32>
    %5 = vector.broadcast %3 : i32 to vector<8x1xi32>
    %6 = arith.addi %5, %4 : vector<8x1xi32>
    %c2_i32 = arith.constant 2 : i32
    %7 = vector.broadcast %c2_i32 : i32 to vector<8x1xi32>
    %8 = arith.cmpi slt, %6, %7 : vector<8x1xi32>
    %cst = arith.constant 0.000000e+00 : f32
    %9 = vector.shape_cast %8 : vector<8x1xi1> to vector<8x1xi1>
    %10 = vector.broadcast %9 : vector<8x1xi1> to vector<8x8xi1>
    %11 = vector.broadcast %cst : f32 to vector<8x8xf32>
    %12 = arith.select %10, %2, %11 : vector<8x8xi1>, vector<8x8xf32>
    %cst_3 = arith.constant dense<0.000000e+00> : vector<8xf32>
    %13 = vector.multi_reduction <add>, %12, %cst_3 [1] : vector<8x8xf32> to vector<8xf32>
    %14 = vector.shape_cast %13 : vector<8xf32> to vector<8x1xf32>
    %cst_4 = arith.constant 1.250000e-01 : f32
    %15 = vector.broadcast %cst_4 : f32 to vector<8x1xf32>
    %16 = arith.mulf %14, %15 : vector<8x1xf32>
    %17 = vector.broadcast %16 : vector<8x1xf32> to vector<8x8xf32>
    %18 = arith.subf %12, %17 : vector<8x8xf32>
    %19 = arith.mulf %18, %18 : vector<8x8xf32>
    %cst_5 = arith.constant dense<0.000000e+00> : vector<8xf32>
    %20 = vector.multi_reduction <add>, %19, %cst_5 [1] : vector<8x8xf32> to vector<8xf32>
    %21 = vector.shape_cast %20 : vector<8xf32> to vector<8x1xf32>
    %cst_6 = arith.constant 1.600000e+01 : f32
    %22 = vector.broadcast %cst_6 : f32 to vector<8x1xf32>
    %23 = arith.mulf %22, %21 : vector<8x1xf32>
    %c0_7 = arith.constant 0 : index
    %c0_8 = arith.constant 0 : index
    %24 = vector.load %arg3[%c0_7, %c0_8] : memref<8x1xf32, #tpu.memory_space<vmem>>, vector<8x1xf32>
    tpu.vector_store %arg3[%c0_7, %c0_8], %23 {strides = array<i32>} : memref<8x1xf32, #tpu.memory_space<vmem>>, vector<8x1xf32>,
    return
  }
  func.func @transform_0(%arg0: i32) -> (i32, i32) {
    %c0_i32 = arith.constant 0 : i32
    %c0_i32_0 = arith.constant 0 : i32
    return %arg0, %c0_i32 : i32, i32
  }
  func.func @transform_1(%arg0: i32) -> (i32, i32) {
    %c0_i32 = arith.constant 0 : i32
    %c0_i32_0 = arith.constant 0 : i32
    return %arg0, %c0_i32 : i32, i32
  }
  func.func @transform_2(%arg0: i32) -> (i32, i32) {
    %c0_i32 = arith.constant 0 : i32
    %c0_i32_0 = arith.constant 0 : i32
    return %arg0, %c0_i32 : i32, i32
  }
}

</mosaic_0001>

<llo_original>
// kernel: tpu_custom_call.1
$region0: #{tpu_custom_call.1}
  #allocation0 [shape = 'u32[]', space=smem, size = 0x4, offset = 0x4, fixed_abs, tag = 'smem constant byte address 0x4 - core index']
  #allocation1 [shape = 'u32[144,128]{1,0:T(1,128)}', space=vmem, size = 0x12000, scoped, tag = 'internal scratch']
  %s0 = inlined_call_operand.hbm [shape: f32[2,8], index: 0, kind: input, shape index: {}]
  %s1 = inlined_call_operand.hbm [shape: f32[2,8], index: 1, kind: input, shape index: {}]
  %s2 = inlined_call_operand.vmem [shape: f32[8,1], index: 2, kind: output, shape index: {}]
  %s3 = sld [smem:[#allocation0]]
  $region26: #{tpu_custom_call.1} parent=0
    _
  %s5 = ssub.s32 1, %s3
  %s6 = scalar_select 0, %s5, %s3
  $region1: #{tpu_custom_call.1} parent=0
    #allocation2 [shape = 'u8[4096]{0}', space=vmem, size = 0x1000, scoped, tag = 'input window, operand 0, single buffered']
    #allocation3 [shape = 's32[1]{0}', space=sflag, size = 0x4, scoped, tag = 'scoped memory for tpu_custom_call.1']
    #allocation4 [shape = 'u8[4096]{0}', space=vmem, size = 0x1000, scoped, tag = 'input window, operand 1, single buffered']
    #allocation5 [shape = 's32[1]{0}', space=sflag, size = 0x4, scoped, tag = 'scoped memory for tpu_custom_call.1']
    %7 = vsyncpa [#allocation3], 0
    %8 = vsyncpa [#allocation5], 0
    // Predicated region
    $region2: #{tpu_custom_call.1} parent=1 // pred_check
      _
    $region3: #{tpu_custom_call.1} parent=1 // pred_check_branch
      %10 = sbr.rel (0) target = $region5
    $region4: #{tpu_custom_call.1} parent=1 // pred_region
      %s12 = ssub.s32 128, 32
      %13 = vsyncadd [#allocation3], %s12
      %s14 = sshll.u32 [#allocation2], 4
      %s15 = int_to_ptr.vmem [resolvable:$true] %s14
      %20 = dma.hbm_to_vmem [thread:$0]  %s0, 32, %s15, [#allocation3], 32, 32, 2
    $region5: #{tpu_custom_call.1} parent=1 // pred_fallthru
      _
    // Predicated region
    $region6: #{tpu_custom_call.1} parent=1 // pred_check
      _
    $region7: #{tpu_custom_call.1} parent=1 // pred_check_branch
      %22 = sbr.rel (0) target = $region9
    $region8: #{tpu_custom_call.1} parent=1 // pred_region
      %s24 = ssub.s32 128, 32
      %25 = vsyncadd [#allocation5], %s24
      %s26 = sshll.u32 [#allocation4], 4
      %s27 = int_to_ptr.vmem [resolvable:$true] %s26
      %32 = dma.hbm_to_vmem [thread:$0]  %s1, 32, %s27, [#allocation5], 32, 32, 2
    $region9: #{tpu_custom_call.1} parent=1 // pred_fallthru
      _
    // Predicated region
    $region10: #{tpu_custom_call.1} parent=1 // pred_check
      _
    $region11: #{tpu_custom_call.1} parent=1 // pred_check_branch
      %34 = sbr.rel (0) target = $region13
    $region12: #{tpu_custom_call.1} parent=1 // pred_region
      %35 = dma.done [#allocation3], 128
    $region13: #{tpu_custom_call.1} parent=1 // pred_fallthru
      _
    // Predicated region
    $region14: #{tpu_custom_call.1} parent=1 // pred_check
      _
    $region15: #{tpu_custom_call.1} parent=1 // pred_check_branch
      %37 = sbr.rel (0) target = $region17
    $region16: #{tpu_custom_call.1} parent=1 // pred_region
      %38 = dma.done [#allocation5], 128
    $region17: #{tpu_custom_call.1} parent=1 // pred_fallthru
      _
    %v39 = vld [vmem:[#allocation2] sm:$0xff]
    %v40 = vld [vmem:[#allocation4] sm:$0xff]
    %v41 = vsub.f32 %v39, %v40
    %s42 = smul.u32 0, 8
    %v43 = vlaneseq
    %v44 = vshrl.u32 %v43, 7
    %v45 = vstv %s42
    %v46 = vadd.s32 %v45, %v44
    %vm47 = vcmp.lt.s32.totalorder %v46, 2
    %v48 = vsel %vm47, 1, 0
    %vm49 = vcmp.eq.s32.totalorder %v48, 1
    %v50 = vsel %vm49, %v41, 0.0
    %vm51 = vcmask 64512
    %v52 = vsel %vm51, %v50, 0.0
    %53 = vadd.xlane.f32.xlu0 %v52
    %v54 = vpop.xlane.xlu0 %53
    %v55 = vmul.f32 %v54, 0.125
    %v56 = vsub.f32 %v50, %v55
    %v57 = vmul.f32 %v56, %v56
    %v58 = vsel %vm51, %v57, 0.0
    %59 = vadd.xlane.f32.xlu0 %v58
    %v60 = vpop.xlane.xlu0 %59
    %v61 = vmul.f32 %v60, 16.0
    %vm62 = vcmask 7168
    %63 = vst.msk [vmem:[%s2] sm:$0xff] %vm62, %v61
    // Predicated region
    $region18: #{tpu_custom_call.1} parent=1 // pred_check
      _
    $region19: #{tpu_custom_call.1} parent=1 // pred_check_branch
      %65 = sbr.rel (0) target = $region21
    $region20: #{tpu_custom_call.1} parent=1 // pred_region
      _
    $region21: #{tpu_custom_call.1} parent=1 // pred_fallthru
      _
    // Predicated region
    $region22: #{tpu_custom_call.1} parent=1 // pred_check
      _
    $region23: #{tpu_custom_call.1} parent=1 // pred_check_branch
      %67 = sbr.rel (0) target = $region25
    $region24: #{tpu_custom_call.1} parent=1 // pred_region
      _
    $region25: #{tpu_custom_call.1} parent=1 // pred_fallthru
      _
    %68 = vsyncpa [#allocation3], 1
    %69 = vsyncpa [#allocation5], 1

</llo_original>
